<compile_context>
chip_gen: v6e
topology: v6e:2x2x1
jax: 0.10.0
libtpu: 0.0.40
codegen_flags: <defaults>
</compile_context>

<pallas_src>
import functools
from typing import NamedTuple

import jax
import jax.numpy as jnp
from jax.experimental import pallas as pl
from jax.experimental.pallas import tpu as pltpu


def _round_up(n, m):
    return (n + m - 1) // m * m


# --------------------------- quantization emulation -------------------------

def _quantize_weight_eval(weight, bits):
    """Eval-mode effective weight of IntLSTMCell (p == 1 -> noise kept everywhere)."""
    # TODO(synk): emulate_int(method='histogram') uses torch's HistogramObserver;
    # approximated here with a min/max affine observer.
    qmax = float(2 ** bits - 1)
    wmin = jnp.minimum(jnp.min(weight), 0.0)
    wmax = jnp.maximum(jnp.max(weight), 0.0)
    scale = jnp.maximum((wmax - wmin) / qmax, 1e-8)
    zero_point = jnp.clip(jnp.round(-wmin / scale), 0.0, qmax)
    wq = (jnp.clip(jnp.round(weight / scale + zero_point), 0.0, qmax)
          - zero_point) * scale
    # Eval mode: p = 1 -> bernoulli(1 - p) mask is all zeros -> noise everywhere.
    noise = wq - weight
    clamp_low = -scale * zero_point
    clamp_high = scale * (qmax - zero_point)
    return jnp.clip(weight, clamp_low, clamp_high) + noise


# -------------------------------- weight prep -------------------------------

class PreparedLSTMWeights(NamedTuple):
    wx: jax.Array            # (xp, 4*hp), matmul dtype  — input  -> gates
    wh: jax.Array            # (hp, 4*hp), matmul dtype  — hidden -> gates
    b: jax.Array             # (1, 4*hp), float32
    input_size: int
    hidden_size: int
    xp: int                  # input_size  padded to a multiple of 128
    hp: int                  # hidden_size padded to a multiple of 128


def prepare_lstm_weights(weight, bias, *, input_size, hidden_size, bits=8,
                         matmul_dtype=jnp.bfloat16):
    """Fake-quantize + re-layout the parameters. Call once per sequence."""
    out_features = 4 * hidden_size
    in_features = input_size + hidden_size
    assert weight.shape == (out_features, in_features)
    assert bias.shape == (out_features,)
    xp = _round_up(input_size, 128)
    hp = _round_up(hidden_size, 128)

    weight_eff = _quantize_weight_eval(weight.astype(jnp.float32), bits)
    w_t = weight_eff.T                                        # (in_features, 4H)
    # Pad each of the 4 gates [f, i, o, u] into a 128-lane-aligned stripe.
    w_pad = jnp.pad(w_t.reshape(in_features, 4, hidden_size),
                    ((0, 0), (0, 0), (0, hp - hidden_size)))
    w_pad = w_pad.reshape(in_features, 4 * hp)
    # Split into x-part / h-part and zero-pad K to a multiple of 128 so the
    # activation loads are lane-dense and the MXU K stepping is unmasked.
    wx = jnp.pad(w_pad[:input_size], ((0, xp - input_size), (0, 0)))
    wh = jnp.pad(w_pad[input_size:], ((0, hp - hidden_size), (0, 0)))
    b_pad = jnp.pad(bias.astype(jnp.float32).reshape(4, hidden_size),
                    ((0, 0), (0, hp - hidden_size))).reshape(1, 4 * hp)
    # TODO(synk): int8 (v5e/v6e) or fp8-e4m3 (v7x) weight storage + scale.
    return PreparedLSTMWeights(wx.astype(matmul_dtype), wh.astype(matmul_dtype),
                               b_pad, input_size, hidden_size, xp, hp)


def pad_state(state, prep: PreparedLSTMWeights):
    """(B, H) f32 state -> padded (B, hp) f32 layout used between steps."""
    h, c = state
    padw = ((0, 0), (0, prep.hp - prep.hidden_size))
    return (jnp.pad(h.astype(jnp.float32), padw),
            jnp.pad(c.astype(jnp.float32), padw))


def unpad_state(state_pad, prep: PreparedLSTMWeights):
    h, c = state_pad
    H = prep.hidden_size
    return h[:, :H], c[:, :H]


# ---------------------------------- kernels ---------------------------------

def _sigmoid_t(x):
    # sigmoid(x) = 0.5*(tanh(x/2) + 1): one EUP push instead of exp + recip.
    return 0.5 * jnp.tanh(0.5 * x) + 0.5


def _gate_math(gates, c, hp):
    # Gate stripes are 128-lane aligned -> free slices (no cross-lane movement).
    f = _sigmoid_t(gates[:, 0 * hp:1 * hp])
    i = _sigmoid_t(gates[:, 1 * hp:2 * hp])
    o = _sigmoid_t(gates[:, 2 * hp:3 * hp])
    u = jnp.tanh(gates[:, 3 * hp:4 * hp])
    new_c = i * u + f * c
    new_h = o * jnp.tanh(new_c)
    return new_h, new_c


def _lstm_cell_kernel(x_ref, h_ref, c_ref, wx_ref, wh_ref, b_ref,
                      h_out_ref, c_out_ref, *, hp):
    dt = wx_ref.dtype
    gates = jnp.dot(x_ref[...], wx_ref[...], preferred_element_type=jnp.float32)
    gates = gates + jnp.dot(h_ref[...].astype(dt), wh_ref[...],
                            preferred_element_type=jnp.float32)
    gates = gates + b_ref[...]
    new_h, new_c = _gate_math(gates, c_ref[...], hp)
    h_out_ref[...] = new_h.astype(h_out_ref.dtype)
    c_out_ref[...] = new_c.astype(c_out_ref.dtype)


def _lstm_seq_kernel(x_ref, h0_ref, c0_ref, wx_ref, wh_ref, b_ref,
                     hseq_ref, c_out_ref, h_scr, c_scr, *, hp):
    t = pl.program_id(1)

    @pl.when(t == 0)
    def _():
        h_scr[...] = h0_ref[...]
        c_scr[...] = c0_ref[...]

    dt = wx_ref.dtype
    gates = jnp.dot(x_ref[...], wx_ref[...], preferred_element_type=jnp.float32)
    gates = gates + jnp.dot(h_scr[...].astype(dt), wh_ref[...],
                            preferred_element_type=jnp.float32)
    gates = gates + b_ref[...]
    new_h, new_c = _gate_math(gates, c_scr[...], hp)
    h_scr[...] = new_h          # recurrent state carried in f32 VMEM scratch
    c_scr[...] = new_c
    hseq_ref[...] = new_h.astype(hseq_ref.dtype)

    @pl.when(t == pl.num_programs(1) - 1)
    def _():
        c_out_ref[...] = new_c.astype(c_out_ref.dtype)


# --------------------------------- wrappers ---------------------------------

def _default_block_b(batch):
    # Single-TC chips (v5e/v6e): one big tile = no per-grid-step overhead.
    # Larger batches: 256-row tiles (v7x 64 MiB VMEM friendly, both TCs busy).
    if batch <= 512:
        return batch
    return 256


def _vmem_limit(prep: PreparedLSTMWeights, block_b):
    """Scoped-VMEM request sized from the real buffer footprint (+ headroom)."""
    itemsize = jnp.dtype(prep.wx.dtype).itemsize
    hp, xp = prep.hp, prep.xp
    w_bytes = (prep.wx.size + prep.wh.size) * itemsize + prep.b.size * 4
    io_bytes = block_b * (xp * itemsize + 6 * hp * 4)        # x tile + h/c in/out
    gates_bytes = block_b * 4 * hp * 4
    need = 2 * (w_bytes + io_bytes) + 2 * gates_bytes + (4 << 20)
    return int(min(max(need, 16 << 20), 64 << 20))


def int_lstm_cell_apply(x, state_pad, prep: PreparedLSTMWeights, *, block_b=None):
    """One LSTM-cell step. `state_pad` is the padded (B, hp) f32 (h, c) pair.

    Keeping the state padded between steps avoids per-step pad/slice HBM
    passes; convert with pad_state()/unpad_state() at the sequence boundary.
    """
    h_pad, c_pad = state_pad
    B = x.shape[0]
    hp, xp = prep.hp, prep.xp
    assert x.shape == (B, prep.input_size)
    assert h_pad.shape == (B, hp) and c_pad.shape == (B, hp)

    if block_b is None:
        block_b = _default_block_b(B)
    grid = (pl.cdiv(B, block_b),)

    matmul_dtype = prep.wx.dtype
    itemsize = jnp.dtype(matmul_dtype).itemsize
    x_pad = jnp.pad(x, ((0, 0), (0, xp - prep.input_size))).astype(matmul_dtype)

    cost = pl.CostEstimate(
        flops=2 * B * (xp + hp) * 4 * hp + 10 * B * hp,
        transcendentals=5 * B * hp,
        bytes_accessed=(x_pad.size * itemsize
                        + (prep.wx.size + prep.wh.size) * itemsize
                        + prep.b.size * 4 + 6 * B * hp * 4),
    )

    kernel = functools.partial(_lstm_cell_kernel, hp=hp)
    new_h, new_c = pl.pallas_call(
        kernel,
        out_shape=(jax.ShapeDtypeStruct((B, hp), jnp.float32),
                   jax.ShapeDtypeStruct((B, hp), jnp.float32)),
        grid=grid,
        in_specs=[
            pl.BlockSpec((block_b, xp), lambda i: (i, 0)),
            pl.BlockSpec((block_b, hp), lambda i: (i, 0)),
            pl.BlockSpec((block_b, hp), lambda i: (i, 0)),
            pl.BlockSpec((xp, 4 * hp), lambda i: (0, 0)),
            pl.BlockSpec((hp, 4 * hp), lambda i: (0, 0)),
            pl.BlockSpec((1, 4 * hp), lambda i: (0, 0)),
        ],
        out_specs=(
            pl.BlockSpec((block_b, hp), lambda i: (i, 0)),
            pl.BlockSpec((block_b, hp), lambda i: (i, 0)),
        ),
        compiler_params=pltpu.CompilerParams(
            dimension_semantics=("parallel",),
            vmem_limit_bytes=_vmem_limit(prep, block_b)),
        cost_estimate=cost,
    )(x_pad, h_pad, c_pad, prep.wx, prep.wh, prep.b)
    return new_h, new_c


def int_lstm_cell_forward(x, state, weight, bias, *, bits=8, block_b=None,
                          matmul_dtype=jnp.bfloat16):
    """One-shot convenience wrapper matching the PyTorch forward (prep + apply)."""
    input_size = x.shape[1]
    hidden_size = state[0].shape[1]
    prep = prepare_lstm_weights(weight, bias, input_size=input_size,
                                hidden_size=hidden_size, bits=bits,
                                matmul_dtype=matmul_dtype)
    new_state = int_lstm_cell_apply(x, pad_state(state, prep), prep,
                                    block_b=block_b)
    return unpad_state(new_state, prep)


def int_lstm_sequence_apply(xs, state, prep: PreparedLSTMWeights, *, block_b=None):
    """Run the cell over xs (T, B, input_size) inside a SINGLE pallas_call.

    T is an 'arbitrary' grid axis; weights have constant index_maps (fetched
    once per batch tile, not T times) and h/c are carried in VMEM scratch.
    Returns (h_seq (T, B, H), (h_T, c_T)).
    """
    T, B = xs.shape[0], xs.shape[1]
    H, hp, xp = prep.hidden_size, prep.hp, prep.xp
    assert xs.shape == (T, B, prep.input_size)

    if block_b is None:
        block_b = _default_block_b(B)
    nb = pl.cdiv(B, block_b)

    matmul_dtype = prep.wx.dtype
    itemsize = jnp.dtype(matmul_dtype).itemsize
    xs_pad = jnp.pad(xs, ((0, 0), (0, 0),
                          (0, xp - prep.input_size))).astype(matmul_dtype)
    h0_pad, c0_pad = pad_state(state, prep)

    cost = pl.CostEstimate(
        flops=T * (2 * B * (xp + hp) * 4 * hp + 10 * B * hp),
        transcendentals=T * 5 * B * hp,
        bytes_accessed=(xs_pad.size * itemsize
                        + nb * (prep.wx.size + prep.wh.size) * itemsize
                        + prep.b.size * 4 + (T + 3) * B * hp * 4),
    )

    kernel = functools.partial(_lstm_seq_kernel, hp=hp)
    h_seq, c_fin = pl.pallas_call(
        kernel,
        out_shape=(jax.ShapeDtypeStruct((T, B, hp), jnp.float32),
                   jax.ShapeDtypeStruct((B, hp), jnp.float32)),
        grid=(nb, T),
        in_specs=[
            pl.BlockSpec((None, block_b, xp), lambda i, t: (t, i, 0)),
            pl.BlockSpec((block_b, hp), lambda i, t: (i, 0)),
            pl.BlockSpec((block_b, hp), lambda i, t: (i, 0)),
            pl.BlockSpec((xp, 4 * hp), lambda i, t: (0, 0)),
            pl.BlockSpec((hp, 4 * hp), lambda i, t: (0, 0)),
            pl.BlockSpec((1, 4 * hp), lambda i, t: (0, 0)),
        ],
        out_specs=(
            pl.BlockSpec((None, block_b, hp), lambda i, t: (t, i, 0)),
            pl.BlockSpec((block_b, hp), lambda i, t: (i, 0)),
        ),
        scratch_shapes=[pltpu.VMEM((block_b, hp), jnp.float32),
                        pltpu.VMEM((block_b, hp), jnp.float32)],
        compiler_params=pltpu.CompilerParams(
            dimension_semantics=("parallel", "arbitrary"),
            vmem_limit_bytes=_vmem_limit(prep, block_b)),
        cost_estimate=cost,
    )(xs_pad, h0_pad, c0_pad, prep.wx, prep.wh, prep.b)

    return h_seq[:, :, :H], (h_seq[-1, :, :H], c_fin[:, :H])


# -------------------------------- reference ---------------------------------

def _reference_forward(x, state, weight, bias, *, bits=8):
    """Pure-JAX reference mirroring the PyTorch eval-mode forward."""
    h, c = state
    H = h.shape[1]
    weight_eff = _quantize_weight_eval(weight, bits)
    lin = jnp.concatenate([x, h], axis=1) @ weight_eff.T + bias
    s = jax.nn.sigmoid(lin[:, :3 * H])
    f, i, o = s[:, :H], s[:, H:2 * H], s[:, 2 * H:3 * H]
    u = jnp.tanh(lin[:, 3 * H:])
    new_c = i * u + f * c
    new_h = o * jnp.tanh(new_c)
    return new_h, new_c


if __name__ == "__main__":
    B, input_size, hidden_size, T = 8, 32, 32, 6
    in_features = input_size + hidden_size
    out_features = 4 * hidden_size

    key = jax.random.PRNGKey(0)
    kx, kh, kc, kw, ks = jax.random.split(key, 5)
    x = jax.random.normal(kx, (B, input_size), dtype=jnp.float32)
    h0 = jax.random.normal(kh, (B, hidden_size), dtype=jnp.float32)
    c0 = jax.random.normal(kc, (B, hidden_size), dtype=jnp.float32)
    xs = jax.random.normal(ks, (T, B, input_size), dtype=jnp.float32)

    # Deterministic parameter init: xavier_uniform_ for weight, zeros for bias.
    bound = (6.0 / (in_features + out_features)) ** 0.5
    weight = jax.random.uniform(kw, (out_features, in_features),
                                minval=-bound, maxval=bound, dtype=jnp.float32)
    bias = jnp.zeros((out_features,), dtype=jnp.float32)

    # --- single step, f32 matmul path: tight check vs pure-JAX reference ----
    h32, c32 = int_lstm_cell_forward(x, (h0, c0), weight, bias, bits=8,
                                     matmul_dtype=jnp.float32)
    jax.block_until_ready((h32, c32))
    ref_h, ref_c = _reference_forward(x, (h0, c0), weight, bias, bits=8)
    assert jnp.allclose(h32, ref_h, atol=1e-5, rtol=1e-5)
    assert jnp.allclose(c32, ref_c, atol=1e-5, rtol=1e-5)

    # --- single step, bf16 matmul path (default fast path): loose check -----
    hbf, cbf = int_lstm_cell_forward(x, (h0, c0), weight, bias, bits=8)
    jax.block_until_ready((hbf, cbf))
    assert jnp.allclose(hbf, ref_h, atol=5e-2, rtol=5e-2)
    assert jnp.allclose(cbf, ref_c, atol=5e-2, rtol=5e-2)

    # --- full sequence inside one pallas_call, f32 matmul path --------------
    prep32 = prepare_lstm_weights(weight, bias, input_size=input_size,
                                  hidden_size=hidden_size, bits=8,
                                  matmul_dtype=jnp.float32)
    h_seq, (h_T, c_T) = int_lstm_sequence_apply(xs, (h0, c0), prep32)
    jax.block_until_ready((h_seq, h_T, c_T))

    rh, rc = h0, c0
    ref_seq = []
    for t in range(T):
        rh, rc = _reference_forward(xs[t], (rh, rc), weight, bias, bits=8)
        ref_seq.append(rh)
    ref_seq = jnp.stack(ref_seq)
    assert jnp.allclose(h_seq, ref_seq, atol=1e-4, rtol=1e-4)
    assert jnp.allclose(h_T, rh, atol=1e-4, rtol=1e-4)
    assert jnp.allclose(c_T, rc, atol=1e-4, rtol=1e-4)

    print("KERNEL_OK")
</pallas_src>

<mosaic_0001>
module attributes {stable_mosaic.version = 11 : i64} {
  func.func @_lstm_cell_kernel(%arg0: i32, %arg1: memref<8x128xf32, #tpu.memory_space<vmem>>, %arg2: memref<8x128xf32, #tpu.memory_space<vmem>>, %arg3: memref<8x128xf32, #tpu.memory_space<vmem>>, %arg4: memref<128x512xf32, #tpu.memory_space<vmem>>, %arg5: memref<128x512xf32, #tpu.memory_space<vmem>>, %arg6: memref<1x512xf32, #tpu.memory_space<vmem>>, %arg7: memref<8x128xf32, #tpu.memory_space<vmem>>, %arg8: memref<8x128xf32, #tpu.memory_space<vmem>>) attributes {dimension_semantics = [#tpu.dimension_semantics<parallel>], iteration_bounds = array<i64: 1>, scalar_prefetch = 0 : i64, scratch_operands = 0 : i64, tpu.core_type = #tpu.core_type<tc>, window_params = [{transform_indices = @transform_0, window_bounds = array<i64: 8, 128>}, {transform_indices = @transform_1, window_bounds = array<i64: 8, 128>}, {transform_indices = @transform_2, window_bounds = array<i64: 8, 128>}, {pipeline_mode = #tpu.pipeline_mode<synchronous>, transform_indices = @transform_3, window_bounds = array<i64: 128, 512>}, {pipeline_mode = #tpu.pipeline_mode<synchronous>, transform_indices = @transform_4, window_bounds = array<i64: 128, 512>}, {pipeline_mode = #tpu.pipeline_mode<synchronous>, transform_indices = @transform_5, window_bounds = array<i64: 1, 512>}, {transform_indices = @transform_6, window_bounds = array<i64: 8, 128>}, {transform_indices = @transform_7, window_bounds = array<i64: 8, 128>}]} {
    %c0 = arith.constant 0 : index
    %c0_0 = arith.constant 0 : index
    %0 = vector.load %arg1[%c0, %c0_0] : memref<8x128xf32, #tpu.memory_space<vmem>>, vector<8x128xf32>
    %c0_1 = arith.constant 0 : index
    %c0_2 = arith.constant 0 : index
    %1 = vector.load %arg4[%c0_1, %c0_2] : memref<128x512xf32, #tpu.memory_space<vmem>>, vector<128x512xf32>
    %cst = arith.constant dense<0.000000e+00> : vector<8x512xf32>
    %2 = tpu.matmul %0, %1, %cst {dimension_numbers = #tpu.dot_dimension_numbers<[1], [0], [0], [1], [0, 0, 1, 1], [], []>} : vector<8x128xf32>, vector<128x512xf32>, vector<8x512xf32> -> vector<8x512xf32>
    %c0_3 = arith.constant 0 : index
    %c0_4 = arith.constant 0 : index
    %3 = vector.load %arg2[%c0_3, %c0_4] : memref<8x128xf32, #tpu.memory_space<vmem>>, vector<8x128xf32>
    %c0_5 = arith.constant 0 : index
    %c0_6 = arith.constant 0 : index
    %4 = vector.load %arg5[%c0_5, %c0_6] : memref<128x512xf32, #tpu.memory_space<vmem>>, vector<128x512xf32>
    %cst_7 = arith.constant dense<0.000000e+00> : vector<8x512xf32>
    %5 = tpu.matmul %3, %4, %cst_7 {dimension_numbers = #tpu.dot_dimension_numbers<[1], [0], [0], [1], [0, 0, 1, 1], [], []>} : vector<8x128xf32>, vector<128x512xf32>, vector<8x512xf32> -> vector<8x512xf32>
    %6 = arith.addf %2, %5 : vector<8x512xf32>
    %c0_8 = arith.constant 0 : index
    %c0_9 = arith.constant 0 : index
    %7 = vector.load %arg6[%c0_8, %c0_9] : memref<1x512xf32, #tpu.memory_space<vmem>>, vector<1x512xf32>
    %8 = vector.broadcast %7 : vector<1x512xf32> to vector<8x512xf32>
    %9 = arith.addf %6, %8 : vector<8x512xf32>
    %c0_10 = arith.constant 0 : index
    %c0_11 = arith.constant 0 : index
    %10 = vector.load %arg3[%c0_10, %c0_11] : memref<8x128xf32, #tpu.memory_space<vmem>>, vector<8x128xf32>
    %11 = vector.extract_strided_slice %9 {offsets = [0, 0], sizes = [8, 128], strides = [1, 1]} : vector<8x512xf32> to vector<8x128xf32>
    %cst_12 = arith.constant 5.000000e-01 : f32
    %12 = vector.broadcast %cst_12 : f32 to vector<8x128xf32>
    %13 = arith.mulf %12, %11 : vector<8x128xf32>
    %14 = math.tanh %13 : vector<8x128xf32>
    %cst_13 = arith.constant 5.000000e-01 : f32
    %15 = vector.broadcast %cst_13 : f32 to vector<8x128xf32>
    %16 = arith.mulf %15, %14 : vector<8x128xf32>
    %cst_14 = arith.constant 5.000000e-01 : f32
    %17 = vector.broadcast %cst_14 : f32 to vector<8x128xf32>
    %18 = arith.addf %16, %17 : vector<8x128xf32>
    %19 = vector.extract_strided_slice %9 {offsets = [0, 128], sizes = [8, 128], strides = [1, 1]} : vector<8x512xf32> to vector<8x128xf32>
    %cst_15 = arith.constant 5.000000e-01 : f32
    %20 = vector.broadcast %cst_15 : f32 to vector<8x128xf32>
    %21 = arith.mulf %20, %19 : vector<8x128xf32>
    %22 = math.tanh %21 : vector<8x128xf32>
    %cst_16 = arith.constant 5.000000e-01 : f32
    %23 = vector.broadcast %cst_16 : f32 to vector<8x128xf32>
    %24 = arith.mulf %23, %22 : vector<8x128xf32>
    %cst_17 = arith.constant 5.000000e-01 : f32
    %25 = vector.broadcast %cst_17 : f32 to vector<8x128xf32>
    %26 = arith.addf %24, %25 : vector<8x128xf32>
    %27 = vector.extract_strided_slice %9 {offsets = [0, 256], sizes = [8, 128], strides = [1, 1]} : vector<8x512xf32> to vector<8x128xf32>
    %cst_18 = arith.constant 5.000000e-01 : f32
    %28 = vector.broadcast %cst_18 : f32 to vector<8x128xf32>
    %29 = arith.mulf %28, %27 : vector<8x128xf32>
    %30 = math.tanh %29 : vector<8x128xf32>
    %cst_19 = arith.constant 5.000000e-01 : f32
    %31 = vector.broadcast %cst_19 : f32 to vector<8x128xf32>
    %32 = arith.mulf %31, %30 : vector<8x128xf32>
    %cst_20 = arith.constant 5.000000e-01 : f32
    %33 = vector.broadcast %cst_20 : f32 to vector<8x128xf32>
    %34 = arith.addf %32, %33 : vector<8x128xf32>
    %35 = vector.extract_strided_slice %9 {offsets = [0, 384], sizes = [8, 128], strides = [1, 1]} : vector<8x512xf32> to vector<8x128xf32>
    %36 = math.tanh %35 : vector<8x128xf32>
    %37 = arith.mulf %26, %36 : vector<8x128xf32>
    %38 = arith.mulf %18, %10 : vector<8x128xf32>
    %39 = arith.addf %37, %38 : vector<8x128xf32>
    %40 = math.tanh %39 : vector<8x128xf32>
    %41 = arith.mulf %34, %40 : vector<8x128xf32>
    %c0_21 = arith.constant 0 : index
    %c0_22 = arith.constant 0 : index
    %42 = vector.load %arg7[%c0_21, %c0_22] : memref<8x128xf32, #tpu.memory_space<vmem>>, vector<8x128xf32>
    tpu.vector_store %arg7[%c0_21, %c0_22], %41 {strides = array<i32>} : memref<8x128xf32, #tpu.memory_space<vmem>>, vector<8x128xf32>,
    %c0_23 = arith.constant 0 : index
    %c0_24 = arith.constant 0 : index
    %43 = vector.load %arg8[%c0_23, %c0_24] : memref<8x128xf32, #tpu.memory_space<vmem>>, vector<8x128xf32>
    tpu.vector_store %arg8[%c0_23, %c0_24], %39 {strides = array<i32>} : memref<8x128xf32, #tpu.memory_space<vmem>>, vector<8x128xf32>,
    return
  }
  func.func @transform_0(%arg0: i32) -> (i32, i32) {
    %c0_i32 = arith.constant 0 : i32
    %c0_i32_0 = arith.constant 0 : i32
    return %arg0, %c0_i32 : i32, i32
  }
  func.func @transform_1(%arg0: i32) -> (i32, i32) {
    %c0_i32 = arith.constant 0 : i32
    %c0_i32_0 = arith.constant 0 : i32
    return %arg0, %c0_i32 : i32, i32
  }
  func.func @transform_2(%arg0: i32) -> (i32, i32) {
    %c0_i32 = arith.constant 0 : i32
    %c0_i32_0 = arith.constant 0 : i32
    return %arg0, %c0_i32 : i32, i32
  }
  func.func @transform_3(%arg0: i32) -> (i32, i32) {
    %c0_i32 = arith.constant 0 : i32
    %c0_i32_0 = arith.constant 0 : i32
    %c0_i32_1 = arith.constant 0 : i32
    return %c0_i32, %c0_i32_0 : i32, i32
  }
  func.func @transform_4(%arg0: i32) -> (i32, i32) {
    %c0_i32 = arith.constant 0 : i32
    %c0_i32_0 = arith.constant 0 : i32
    %c0_i32_1 = arith.constant 0 : i32
    return %c0_i32, %c0_i32_0 : i32, i32
  }
  func.func @transform_5(%arg0: i32) -> (i32, i32) {
    %c0_i32 = arith.constant 0 : i32
    %c0_i32_0 = arith.constant 0 : i32
    %c0_i32_1 = arith.constant 0 : i32
    return %c0_i32, %c0_i32_0 : i32, i32
  }
  func.func @transform_6(%arg0: i32) -> (i32, i32) {
    %c0_i32 = arith.constant 0 : i32
    %c0_i32_0 = arith.constant 0 : i32
    return %arg0, %c0_i32 : i32, i32
  }
  func.func @transform_7(%arg0: i32) -> (i32, i32) {
    %c0_i32 = arith.constant 0 : i32
    %c0_i32_0 = arith.constant 0 : i32
    return %arg0, %c0_i32 : i32, i32
  }
}

</mosaic_0001>

<llo_original>
// kernel: tpu_custom_call.1
$region0: #{tpu_custom_call.1}
  #allocation0 [shape = 'u32[]', space=smem, size = 0x4, offset = 0x4, fixed_abs, tag = 'smem constant byte address 0x4 - core index']
  #allocation1 [shape = 'u32[144,128]{1,0:T(1,128)}', space=vmem, size = 0x12000, scoped, tag = 'internal scratch']
  %s0 = inlined_call_operand.hbm [shape: f32[8,128], index: 0, kind: input, shape index: {}]
  %s1 = inlined_call_operand.hbm [shape: f32[8,128], index: 1, kind: input, shape index: {}]
  %s2 = inlined_call_operand.hbm [shape: f32[8,128], index: 2, kind: input, shape index: {}]
  %s3 = inlined_call_operand.hbm [shape: f32[128,512], index: 3, kind: input, shape index: {}]
  %s4 = inlined_call_operand.hbm [shape: f32[128,512], index: 4, kind: input, shape index: {}]
  %s5 = inlined_call_operand.vmem [shape: f32[1,512], index: 5, kind: input, shape index: {}]
  %s6 = inlined_call_operand.hbm [shape: f32[8,128], index: 6, kind: output, shape index: {0}]
  %s7 = inlined_call_operand.hbm [shape: f32[8,128], index: 7, kind: output, shape index: {1}]
  %8 = xla_tuple %s6, %s7
  %s9 = sld [smem:[#allocation0]]
  $region62: #{tpu_custom_call.1} parent=0
    _
  %s11 = ssub.s32 1, %s9
  %s12 = scalar_select 0, %s11, %s9
  $region1: #{tpu_custom_call.1} parent=0
    #allocation2 [shape = 'u8[4096]{0}', space=vmem, size = 0x1000, scoped, tag = 'input window, operand 0, single buffered']
    #allocation3 [shape = 's32[1]{0}', space=sflag, size = 0x4, scoped, tag = 'scoped memory for tpu_custom_call.1']
    #allocation4 [shape = 's32[1]{0}', space=sflag, size = 0x4, scoped, tag = 'scoped memory for tpu_custom_call.1']
    #allocation5 [shape = 'u8[4096]{0}', space=vmem, size = 0x1000, scoped, tag = 'input window, operand 1, single buffered']
    #allocation6 [shape = 's32[1]{0}', space=sflag, size = 0x4, scoped, tag = 'scoped memory for tpu_custom_call.1']
    #allocation7 [shape = 'u8[4096]{0}', space=vmem, size = 0x1000, scoped, tag = 'input window, operand 2, single buffered']
    #allocation8 [shape = 'u8[262144]{0}', space=vmem, size = 0x40000, scoped, tag = 'input window, operand 3, single buffered']
    #allocation9 [shape = 's32[1]{0}', space=sflag, size = 0x4, scoped, tag = 'scoped memory for tpu_custom_call.1']
    #allocation10 [shape = 'u8[262144]{0}', space=vmem, size = 0x40000, scoped, tag = 'input window, operand 4, single buffered']
    #allocation11 [shape = 'u8[4096]{0}', space=vmem, size = 0x1000, scoped, tag = 'output window, operand 0, single buffered']
    #allocation12 [shape = 'u8[4096]{0}', space=vmem, size = 0x1000, scoped, tag = 'output window, operand 1, single buffered']
    #allocation13 [shape = 's32[1]{0}', space=sflag, size = 0x4, scoped, tag = 'scoped memory for tpu_custom_call.1']
    %13 = vsyncpa [#allocation3], 0
    %14 = vsyncpa [#allocation6], 0
    %15 = vsyncpa [#allocation9], 0
    %16 = vsyncpa [#allocation4], 0
    %17 = vsyncpa [#allocation13], 0
    // Predicated region
    $region2: #{tpu_custom_call.1} parent=1 // pred_check
      _
    $region3: #{tpu_custom_call.1} parent=1 // pred_check_branch
      %19 = sbr.rel (0) target = $region5
    $region4: #{tpu_custom_call.1} parent=1 // pred_region
      %s21 = ssub.s32 128, 128
      %22 = vsyncadd [#allocation3], %s21
      %s24 = sshll.u32 [#allocation2], 4
      %s25 = int_to_ptr.vmem [resolvable:$true] %s24
      %27 = dma.hbm_to_vmem [thread:$0]  %s0, 128, %s25, [#allocation3]
    $region5: #{tpu_custom_call.1} parent=1 // pred_fallthru
      _
    // Predicated region
    $region6: #{tpu_custom_call.1} parent=1 // pred_check
      _
    $region7: #{tpu_custom_call.1} parent=1 // pred_check_branch
      %29 = sbr.rel (0) target = $region9
    $region8: #{tpu_custom_call.1} parent=1 // pred_region
      %s31 = ssub.s32 128, 128
      %32 = vsyncadd [#allocation6], %s31
      %s34 = sshll.u32 [#allocation5], 4
      %s35 = int_to_ptr.vmem [resolvable:$true] %s34
      %37 = dma.hbm_to_vmem [thread:$0]  %s1, 128, %s35, [#allocation6]
    $region9: #{tpu_custom_call.1} parent=1 // pred_fallthru
      _
    // Predicated region
    $region10: #{tpu_custom_call.1} parent=1 // pred_check
      _
    $region11: #{tpu_custom_call.1} parent=1 // pred_check_branch
      %39 = sbr.rel (0) target = $region13
    $region12: #{tpu_custom_call.1} parent=1 // pred_region
      %s41 = ssub.s32 128, 128
      %42 = vsyncadd [#allocation6], %s41
      %s44 = sshll.u32 [#allocation7], 4
      %s45 = int_to_ptr.vmem [resolvable:$true] %s44
      %47 = dma.hbm_to_vmem [thread:$0]  %s2, 128, %s45, [#allocation6]
    $region13: #{tpu_custom_call.1} parent=1 // pred_fallthru
      _
    // Predicated region
    $region14: #{tpu_custom_call.1} parent=1 // pred_check
      _
    $region15: #{tpu_custom_call.1} parent=1 // pred_check_branch
      %49 = sbr.rel (0) target = $region17
    $region16: #{tpu_custom_call.1} parent=1 // pred_region
      %s51 = ssub.s32 8192, 8192
      %52 = vsyncadd [#allocation9], %s51
      %s53 = sshll.u32 [#allocation8], 4
      %s54 = int_to_ptr.vmem [resolvable:$true] %s53
      %59 = dma.hbm_to_vmem [thread:$0]  %s3, 8192, %s54, [#allocation9], 512, 512, 32
    $region17: #{tpu_custom_call.1} parent=1 // pred_fallthru
      _
    // Predicated region
    $region18: #{tpu_custom_call.1} parent=1 // pred_check
      _
    $region19: #{tpu_custom_call.1} parent=1 // pred_check_branch
      %61 = sbr.rel (0) target = $region21
    $region20: #{tpu_custom_call.1} parent=1 // pred_region
      %s63 = ssub.s32 8192, 8192
      %64 = vsyncadd [#allocation9], %s63
      %s65 = sshll.u32 [#allocation10], 4
      %s66 = int_to_ptr.vmem [resolvable:$true] %s65
      %71 = dma.hbm_to_vmem [thread:$0]  %s4, 8192, %s66, [#allocation9], 512, 512, 32
    $region21: #{tpu_custom_call.1} parent=1 // pred_fallthru
      _
    // Predicated region
    $region22: #{tpu_custom_call.1} parent=1 // pred_check
      _
    $region23: #{tpu_custom_call.1} parent=1 // pred_check_branch
      %73 = sbr.rel (0) target = $region25
    $region24: #{tpu_custom_call.1} parent=1 // pred_region
      _
    $region25: #{tpu_custom_call.1} parent=1 // pred_fallthru
      _
    // Predicated region
    $region26: #{tpu_custom_call.1} parent=1 // pred_check
      _
    $region27: #{tpu_custom_call.1} parent=1 // pred_check_branch
      %75 = sbr.rel (0) target = $region29
    $region28: #{tpu_custom_call.1} parent=1 // pred_region
      %76 = dma.done [#allocation3], 128
    $region29: #{tpu_custom_call.1} parent=1 // pred_fallthru
      _
    // Predicated region
    $region30: #{tpu_custom_call.1} parent=1 // pred_check
      _
    $region31: #{tpu_custom_call.1} parent=1 // pred_check_branch
      %78 = sbr.rel (0) target = $region33
    $region32: #{tpu_custom_call.1} parent=1 // pred_region
      %79 = dma.done [#allocation6], 128
    $region33: #{tpu_custom_call.1} parent=1 // pred_fallthru
      _
    // Predicated region
    $region34: #{tpu_custom_call.1} parent=1 // pred_check
      _
    $region35: #{tpu_custom_call.1} parent=1 // pred_check_branch
      %81 = sbr.rel (0) target = $region37
    $region36: #{tpu_custom_call.1} parent=1 // pred_region
      %82 = dma.done [#allocation6], 128
    $region37: #{tpu_custom_call.1} parent=1 // pred_fallthru
      _
    // Predicated region
    $region38: #{tpu_custom_call.1} parent=1 // pred_check
      _
    $region39: #{tpu_custom_call.1} parent=1 // pred_check_branch
      %84 = sbr.rel (0) target = $region41
    $region40: #{tpu_custom_call.1} parent=1 // pred_region
      %85 = dma.done [#allocation9], 8192
    $region41: #{tpu_custom_call.1} parent=1 // pred_fallthru
      _
    // Predicated region
    $region42: #{tpu_custom_call.1} parent=1 // pred_check
      _
    $region43: #{tpu_custom_call.1} parent=1 // pred_check_branch
      %87 = sbr.rel (0) target = $region45
    $region44: #{tpu_custom_call.1} parent=1 // pred_region
      %88 = dma.done [#allocation9], 8192
    $region45: #{tpu_custom_call.1} parent=1 // pred_fallthru
      _
    %v89 = vld [vmem:[#allocation2] sm:$0xff]
    %v90 = vld [vmem:[#allocation8] sm:$0xff]
    %v91 = vld [vmem:[#allocation8 + $0x8] sm:$0xff]
    %v92 = vld [vmem:[#allocation8 + $0x10] sm:$0xff]
    %v93 = vld [vmem:[#allocation8 + $0x18] sm:$0xff]
    %v94 = vld [vmem:[#allocation8 + $0x20] sm:$0xff]
    %v95 = vld [vmem:[#allocation8 + $0x28] sm:$0xff]
    %v96 = vld [vmem:[#allocation8 + $0x30] sm:$0xff]
    %v97 = vld [vmem:[#allocation8 + $0x38] sm:$0xff]
    %v98 = vld [vmem:[#allocation8 + $0x40] sm:$0xff]
    %v99 = vld [vmem:[#allocation8 + $0x48] sm:$0xff]
    %v100 = vld [vmem:[#allocation8 + $0x50] sm:$0xff]
    %v101 = vld [vmem:[#allocation8 + $0x58] sm:$0xff]
    %v102 = vld [vmem:[#allocation8 + $0x60] sm:$0xff]
    %v103 = vld [vmem:[#allocation8 + $0x68] sm:$0xff]
    %v104 = vld [vmem:[#allocation8 + $0x70] sm:$0xff]
    %v105 = vld [vmem:[#allocation8 + $0x78] sm:$0xff]
    %v106 = vld [vmem:[#allocation8 + $0x80] sm:$0xff]
    %v107 = vld [vmem:[#allocation8 + $0x88] sm:$0xff]
    %v108 = vld [vmem:[#allocation8 + $0x90] sm:$0xff]
    %v109 = vld [vmem:[#allocation8 + $0x98] sm:$0xff]
    %v110 = vld [vmem:[#allocation8 + $0xa0] sm:$0xff]
    %v111 = vld [vmem:[#allocation8 + $0xa8] sm:$0xff]
    %v112 = vld [vmem:[#allocation8 + $0xb0] sm:$0xff]
    %v113 = vld [vmem:[#allocation8 + $0xb8] sm:$0xff]
    %v114 = vld [vmem:[#allocation8 + $0xc0] sm:$0xff]
    %v115 = vld [vmem:[#allocation8 + $0xc8] sm:$0xff]
    %v116 = vld [vmem:[#allocation8 + $0xd0] sm:$0xff]
    %v117 = vld [vmem:[#allocation8 + $0xd8] sm:$0xff]
    %v118 = vld [vmem:[#allocation8 + $0xe0] sm:$0xff]
    %v119 = vld [vmem:[#allocation8 + $0xe8] sm:$0xff]
    %v120 = vld [vmem:[#allocation8 + $0xf0] sm:$0xff]
    %v121 = vld [vmem:[#allocation8 + $0xf8] sm:$0xff]
    %v122 = vld [vmem:[#allocation8 + $0x100] sm:$0xff]
    %v123 = vld [vmem:[#allocation8 + $0x108] sm:$0xff]
    %v124 = vld [vmem:[#allocation8 + $0x110] sm:$0xff]
    %v125 = vld [vmem:[#allocation8 + $0x118] sm:$0xff]
    %v126 = vld [vmem:[#allocation8 + $0x120] sm:$0xff]
    %v127 = vld [vmem:[#allocation8 + $0x128] sm:$0xff]
    %v128 = vld [vmem:[#allocation8 + $0x130] sm:$0xff]
    %v129 = vld [vmem:[#allocation8 + $0x138] sm:$0xff]
    %v130 = vld [vmem:[#allocation8 + $0x140] sm:$0xff]
    %v131 = vld [vmem:[#allocation8 + $0x148] sm:$0xff]
    %v132 = vld [vmem:[#allocation8 + $0x150] sm:$0xff]
    %v133 = vld [vmem:[#allocation8 + $0x158] sm:$0xff]
    %v134 = vld [vmem:[#allocation8 + $0x160] sm:$0xff]
    %v135 = vld [vmem:[#allocation8 + $0x168] sm:$0xff]
    %v136 = vld [vmem:[#allocation8 + $0x170] sm:$0xff]
    %v137 = vld [vmem:[#allocation8 + $0x178] sm:$0xff]
    %v138 = vld [vmem:[#allocation8 + $0x180] sm:$0xff]
    %v139 = vld [vmem:[#allocation8 + $0x188] sm:$0xff]
    %v140 = vld [vmem:[#allocation8 + $0x190] sm:$0xff]
    %v141 = vld [vmem:[#allocation8 + $0x198] sm:$0xff]
    %v142 = vld [vmem:[#allocation8 + $0x1a0] sm:$0xff]
    %v143 = vld [vmem:[#allocation8 + $0x1a8] sm:$0xff]
    %v144 = vld [vmem:[#allocation8 + $0x1b0] sm:$0xff]
    %v145 = vld [vmem:[#allocation8 + $0x1b8] sm:$0xff]
    %v146 = vld [vmem:[#allocation8 + $0x1c0] sm:$0xff]
    %v147 = vld [vmem:[#allocation8 + $0x1c8] sm:$0xff]
    %v148 = vld [vmem:[#allocation8 + $0x1d0] sm:$0xff]
    %v149 = vld [vmem:[#allocation8 + $0x1d8] sm:$0xff]
    %v150 = vld [vmem:[#allocation8 + $0x1e0] sm:$0xff]
    %v151 = vld [vmem:[#allocation8 + $0x1e8] sm:$0xff]
    %v152 = vld [vmem:[#allocation8 + $0x1f0] sm:$0xff]
    %v153 = vld [vmem:[#allocation8 + $0x1f8] sm:$0xff]
    %v154 = vld [vmem:[#allocation5] sm:$0xff]
    %v155 = vld [vmem:[#allocation10] sm:$0xff]
    %v156 = vld [vmem:[#allocation10 + $0x8] sm:$0xff]
    %v157 = vld [vmem:[#allocation10 + $0x10] sm:$0xff]
    %v158 = vld [vmem:[#allocation10 + $0x18] sm:$0xff]
    %v159 = vld [vmem:[#allocation10 + $0x20] sm:$0xff]
    %v160 = vld [vmem:[#allocation10 + $0x28] sm:$0xff]
    %v161 = vld [vmem:[#allocation10 + $0x30] sm:$0xff]
    %v162 = vld [vmem:[#allocation10 + $0x38] sm:$0xff]
    %v163 = vld [vmem:[#allocation10 + $0x40] sm:$0xff]
    %v164 = vld [vmem:[#allocation10 + $0x48] sm:$0xff]
    %v165 = vld [vmem:[#allocation10 + $0x50] sm:$0xff]
    %v166 = vld [vmem:[#allocation10 + $0x58] sm:$0xff]
    %v167 = vld [vmem:[#allocation10 + $0x60] sm:$0xff]
    %v168 = vld [vmem:[#allocation10 + $0x68] sm:$0xff]
    %v169 = vld [vmem:[#allocation10 + $0x70] sm:$0xff]
    %v170 = vld [vmem:[#allocation10 + $0x78] sm:$0xff]
    %v171 = vld [vmem:[#allocation10 + $0x80] sm:$0xff]
    %v172 = vld [vmem:[#allocation10 + $0x88] sm:$0xff]
    %v173 = vld [vmem:[#allocation10 + $0x90] sm:$0xff]
    %v174 = vld [vmem:[#allocation10 + $0x98] sm:$0xff]
    %v175 = vld [vmem:[#allocation10 + $0xa0] sm:$0xff]
    %v176 = vld [vmem:[#allocation10 + $0xa8] sm:$0xff]
    %v177 = vld [vmem:[#allocation10 + $0xb0] sm:$0xff]
    %v178 = vld [vmem:[#allocation10 + $0xb8] sm:$0xff]
    %v179 = vld [vmem:[#allocation10 + $0xc0] sm:$0xff]
    %v180 = vld [vmem:[#allocation10 + $0xc8] sm:$0xff]
    %v181 = vld [vmem:[#allocation10 + $0xd0] sm:$0xff]
    %v182 = vld [vmem:[#allocation10 + $0xd8] sm:$0xff]
    %v183 = vld [vmem:[#allocation10 + $0xe0] sm:$0xff]
    %v184 = vld [vmem:[#allocation10 + $0xe8] sm:$0xff]
    %v185 = vld [vmem:[#allocation10 + $0xf0] sm:$0xff]
    %v186 = vld [vmem:[#allocation10 + $0xf8] sm:$0xff]
    %v187 = vld [vmem:[#allocation10 + $0x100] sm:$0xff]
    %v188 = vld [vmem:[#allocation10 + $0x108] sm:$0xff]
    %v189 = vld [vmem:[#allocation10 + $0x110] sm:$0xff]
    %v190 = vld [vmem:[#allocation10 + $0x118] sm:$0xff]
    %v191 = vld [vmem:[#allocation10 + $0x120] sm:$0xff]
    %v192 = vld [vmem:[#allocation10 + $0x128] sm:$0xff]
    %v193 = vld [vmem:[#allocation10 + $0x130] sm:$0xff]
    %v194 = vld [vmem:[#allocation10 + $0x138] sm:$0xff]
    %v195 = vld [vmem:[#allocation10 + $0x140] sm:$0xff]
    %v196 = vld [vmem:[#allocation10 + $0x148] sm:$0xff]
    %v197 = vld [vmem:[#allocation10 + $0x150] sm:$0xff]
    %v198 = vld [vmem:[#allocation10 + $0x158] sm:$0xff]
    %v199 = vld [vmem:[#allocation10 + $0x160] sm:$0xff]
    %v200 = vld [vmem:[#allocation10 + $0x168] sm:$0xff]
    %v201 = vld [vmem:[#allocation10 + $0x170] sm:$0xff]
    %v202 = vld [vmem:[#allocation10 + $0x178] sm:$0xff]
    %v203 = vld [vmem:[#allocation10 + $0x180] sm:$0xff]
    %v204 = vld [vmem:[#allocation10 + $0x188] sm:$0xff]
    %v205 = vld [vmem:[#allocation10 + $0x190] sm:$0xff]
    %v206 = vld [vmem:[#allocation10 + $0x198] sm:$0xff]
    %v207 = vld [vmem:[#allocation10 + $0x1a0] sm:$0xff]
    %v208 = vld [vmem:[#allocation10 + $0x1a8] sm:$0xff]
    %v209 = vld [vmem:[#allocation10 + $0x1b0] sm:$0xff]
    %v210 = vld [vmem:[#allocation10 + $0x1b8] sm:$0xff]
    %v211 = vld [vmem:[#allocation10 + $0x1c0] sm:$0xff]
    %v212 = vld [vmem:[#allocation10 + $0x1c8] sm:$0xff]
    %v213 = vld [vmem:[#allocation10 + $0x1d0] sm:$0xff]
    %v214 = vld [vmem:[#allocation10 + $0x1d8] sm:$0xff]
    %v215 = vld [vmem:[#allocation10 + $0x1e0] sm:$0xff]
    %v216 = vld [vmem:[#allocation10 + $0x1e8] sm:$0xff]
    %v217 = vld [vmem:[#allocation10 + $0x1f0] sm:$0xff]
    %v218 = vld [vmem:[#allocation10 + $0x1f8] sm:$0xff]
    %219 = vmatprep.subr.mxu0 %v216
    %220 = vmatpush1.msra.mxu0 %v215
    %221 = vmatprep.subr.mxu0 %v212
    %222 = vmatpush1.msra.mxu0 %v211
    %223 = vmatprep.subr.mxu0 %v208
    %224 = vmatpush1.msra.mxu0 %v207
    %225 = vmatprep.subr.mxu0 %v204
    %226 = vmatpush1.msra.mxu0 %v203
    %227 = vmatprep.subr.mxu0 %v200
    %228 = vmatpush1.msra.mxu0 %v199
    %229 = vmatprep.subr.mxu0 %v196
    %230 = vmatpush1.msra.mxu0 %v195
    %231 = vmatprep.subr.mxu0 %v192
    %232 = vmatpush1.msra.mxu0 %v191
    %233 = vmatprep.subr.mxu0 %v188
    %234 = vmatpush1.msra.mxu0 %v187
    %235 = vmatprep.subr.mxu0 %v184
    %236 = vmatpush1.msra.mxu0 %v183
    %237 = vmatprep.subr.mxu0 %v180
    %238 = vmatpush1.msra.mxu0 %v179
    %239 = vmatprep.subr.mxu0 %v176
    %240 = vmatpush1.msra.mxu0 %v175
    %241 = vmatprep.subr.mxu0 %v172
    %242 = vmatpush1.msra.mxu0 %v171
    %243 = vmatprep.subr.mxu0 %v168
    %244 = vmatpush1.msra.mxu0 %v167
    %245 = vmatprep.subr.mxu0 %v164
    %246 = vmatpush1.msra.mxu0 %v163
    %247 = vmatprep.subr.mxu0 %v160
    %248 = vmatpush1.msra.mxu0 %v159
    %249 = vmatprep.subr.mxu0 %v156
    %250 = vmatpush1.msra.mxu0 %v155
    %251 = vmatprep.subr.mxu0 0.0
    %252 = vmatpush2.msra.mxu0 0.0
    %253 = vmatprep.subr.mxu0 0.0
    %254 = vmatpush2.msra.mxu0 0.0
    %255 = vmatprep.subr.mxu0 0.0
    %256 = vmatpush2.msra.mxu0 0.0
    %257 = vmatprep.subr.mxu0 0.0
    %258 = vmatpush2.msra.mxu0 0.0
    %259 = vmatprep.subr.mxu0 0.0
    %260 = vmatpush2.msra.mxu0 0.0
    %261 = vmatprep.subr.mxu0 0.0
    %262 = vmatpush2.msra.mxu0 0.0
    %263 = vmatprep.subr.mxu0 0.0
    %264 = vmatpush2.msra.mxu0 0.0
    %265 = vmatprep.subr.mxu0 0.0
    %266 = vmatpush2.msra.mxu0 0.0
    %267 = vmatprep.subr.mxu0 0.0
    %268 = vmatpush2.msra.mxu0 0.0
    %269 = vmatprep.subr.mxu0 0.0
    %270 = vmatpush2.msra.mxu0 0.0
    %271 = vmatprep.subr.mxu0 0.0
    %272 = vmatpush2.msra.mxu0 0.0
    %273 = vmatprep.subr.mxu0 0.0
    %274 = vmatpush2.msra.mxu0 0.0
    %275 = vmatprep.subr.mxu0 0.0
    %276 = vmatpush2.msra.mxu0 0.0
    %277 = vmatprep.subr.mxu0 0.0
    %278 = vmatpush2.msra.mxu0 0.0
    %279 = vmatprep.subr.mxu0 0.0
    %280 = vmatpush2.msra.mxu0 0.0
    %281 = vmatprep.subr.mxu0 0.0
    %282 = vmatpush2.msra.mxu0 0.0
    %283 = vmatprep.mubr.f32.mxu0 0.0
    %284 = vmatmul.mubr.f32.gmra.mxu0 %v154
    %v285 = vpop.f32.mrf.mxu0
    %v286 = vadd.f32 0.0, %v285
    %v287 = vpop.f32.mrf.mxu0
    %v288 = vadd.f32 0.0, %v287
    %289 = vdwg.mxu0
    %290 = vmatprep.subr.mxu0 %v218
    %291 = vmatpush1.msra.mxu0 %v217
    %292 = vmatprep.subr.mxu0 %v214
    %293 = vmatpush1.msra.mxu0 %v213
    %294 = vmatprep.subr.mxu0 %v210
    %295 = vmatpush1.msra.mxu0 %v209
    %296 = vmatprep.subr.mxu0 %v206
    %297 = vmatpush1.msra.mxu0 %v205
    %298 = vmatprep.subr.mxu0 %v202
    %299 = vmatpush1.msra.mxu0 %v201
    %300 = vmatprep.subr.mxu0 %v198
    %301 = vmatpush1.msra.mxu0 %v197
    %302 = vmatprep.subr.mxu0 %v194
    %303 = vmatpush1.msra.mxu0 %v193
    %304 = vmatprep.subr.mxu0 %v190
    %305 = vmatpush1.msra.mxu0 %v189
    %306 = vmatprep.subr.mxu0 %v186
    %307 = vmatpush1.msra.mxu0 %v185
    %308 = vmatprep.subr.mxu0 %v182
    %309 = vmatpush1.msra.mxu0 %v181
    %310 = vmatprep.subr.mxu0 %v178
    %311 = vmatpush1.msra.mxu0 %v177
    %312 = vmatprep.subr.mxu0 %v174
    %313 = vmatpush1.msra.mxu0 %v173
    %314 = vmatprep.subr.mxu0 %v170
    %315 = vmatpush1.msra.mxu0 %v169
    %316 = vmatprep.subr.mxu0 %v166
    %317 = vmatpush1.msra.mxu0 %v165
    %318 = vmatprep.subr.mxu0 %v162
    %319 = vmatpush1.msra.mxu0 %v161
    %320 = vmatprep.subr.mxu0 %v158
    %321 = vmatpush1.msra.mxu0 %v157
    %322 = vmatprep.subr.mxu0 0.0
    %323 = vmatpush2.msra.mxu0 0.0
    %324 = vmatprep.subr.mxu0 0.0
    %325 = vmatpush2.msra.mxu0 0.0
    %326 = vmatprep.subr.mxu0 0.0
    %327 = vmatpush2.msra.mxu0 0.0
    %328 = vmatprep.subr.mxu0 0.0
    %329 = vmatpush2.msra.mxu0 0.0
    %330 = vmatprep.subr.mxu0 0.0
    %331 = vmatpush2.msra.mxu0 0.0
    %332 = vmatprep.subr.mxu0 0.0
    %333 = vmatpush2.msra.mxu0 0.0
    %334 = vmatprep.subr.mxu0 0.0
    %335 = vmatpush2.msra.mxu0 0.0
    %336 = vmatprep.subr.mxu0 0.0
    %337 = vmatpush2.msra.mxu0 0.0
    %338 = vmatprep.subr.mxu0 0.0
    %339 = vmatpush2.msra.mxu0 0.0
    %340 = vmatprep.subr.mxu0 0.0
    %341 = vmatpush2.msra.mxu0 0.0
    %342 = vmatprep.subr.mxu0 0.0
    %343 = vmatpush2.msra.mxu0 0.0
    %344 = vmatprep.subr.mxu0 0.0
    %345 = vmatpush2.msra.mxu0 0.0
    %346 = vmatprep.subr.mxu0 0.0
    %347 = vmatpush2.msra.mxu0 0.0
    %348 = vmatprep.subr.mxu0 0.0
    %349 = vmatpush2.msra.mxu0 0.0
    %350 = vmatprep.subr.mxu0 0.0
    %351 = vmatpush2.msra.mxu0 0.0
    %352 = vmatprep.subr.mxu0 0.0
    %353 = vmatpush2.msra.mxu0 0.0
    %354 = vmatprep.mubr.f32.mxu0 0.0
    %355 = vmatmul.mubr.f32.gmra.mxu0 %v154
    %v356 = vpop.f32.mrf.mxu0
    %v357 = vadd.f32 0.0, %v356
    %v358 = vpop.f32.mrf.mxu0
    %v359 = vadd.f32 0.0, %v358
    %360 = vdwg.mxu0
    %361 = vmatprep.subr.mxu0 %v151
    %362 = vmatpush1.msra.mxu0 %v150
    %363 = vmatprep.subr.mxu0 %v147
    %364 = vmatpush1.msra.mxu0 %v146
    %365 = vmatprep.subr.mxu0 %v143
    %366 = vmatpush1.msra.mxu0 %v142
    %367 = vmatprep.subr.mxu0 %v139
    %368 = vmatpush1.msra.mxu0 %v138
    %369 = vmatprep.subr.mxu0 %v135
    %370 = vmatpush1.msra.mxu0 %v134
    %371 = vmatprep.subr.mxu0 %v131
    %372 = vmatpush1.msra.mxu0 %v130
    %373 = vmatprep.subr.mxu0 %v127
    %374 = vmatpush1.msra.mxu0 %v126
    %375 = vmatprep.subr.mxu0 %v123
    %376 = vmatpush1.msra.mxu0 %v122
    %377 = vmatprep.subr.mxu0 %v119
    %378 = vmatpush1.msra.mxu0 %v118
    %379 = vmatprep.subr.mxu0 %v115
    %380 = vmatpush1.msra.mxu0 %v114
    %381 = vmatprep.subr.mxu0 %v111
    %382 = vmatpush1.msra.mxu0 %v110
    %383 = vmatprep.subr.mxu0 %v107
    %384 = vmatpush1.msra.mxu0 %v106
    %385 = vmatprep.subr.mxu0 %v103
    %386 = vmatpush1.msra.mxu0 %v102
    %387 = vmatprep.subr.mxu0 %v99
    %388 = vmatpush1.msra.mxu0 %v98
    %389 = vmatprep.subr.mxu0 %v95
    %390 = vmatpush1.msra.mxu0 %v94
    %391 = vmatprep.subr.mxu0 %v91
    %392 = vmatpush1.msra.mxu0 %v90
    %393 = vmatprep.subr.mxu0 0.0
    %394 = vmatpush2.msra.mxu0 0.0
    %395 = vmatprep.subr.mxu0 0.0
    %396 = vmatpush2.msra.mxu0 0.0
    %397 = vmatprep.subr.mxu0 0.0
    %398 = vmatpush2.msra.mxu0 0.0
    %399 = vmatprep.subr.mxu0 0.0
    %400 = vmatpush2.msra.mxu0 0.0
    %401 = vmatprep.subr.mxu0 0.0
    %402 = vmatpush2.msra.mxu0 0.0
    %403 = vmatprep.subr.mxu0 0.0
    %404 = vmatpush2.msra.mxu0 0.0
    %405 = vmatprep.subr.mxu0 0.0
    %406 = vmatpush2.msra.mxu0 0.0
    %407 = vmatprep.subr.mxu0 0.0
    %408 = vmatpush2.msra.mxu0 0.0
    %409 = vmatprep.subr.mxu0 0.0
    %410 = vmatpush2.msra.mxu0 0.0
    %411 = vmatprep.subr.mxu0 0.0
    %412 = vmatpush2.msra.mxu0 0.0
    %413 = vmatprep.subr.mxu0 0.0
    %414 = vmatpush2.msra.mxu0 0.0
    %415 = vmatprep.subr.mxu0 0.0
    %416 = vmatpush2.msra.mxu0 0.0
    %417 = vmatprep.subr.mxu0 0.0
    %418 = vmatpush2.msra.mxu0 0.0
    %419 = vmatprep.subr.mxu0 0.0
    %420 = vmatpush2.msra.mxu0 0.0
    %421 = vmatprep.subr.mxu0 0.0
    %422 = vmatpush2.msra.mxu0 0.0
    %423 = vmatprep.subr.mxu0 0.0
    %424 = vmatpush2.msra.mxu0 0.0
    %425 = vmatprep.mubr.f32.mxu0 0.0
    %426 = vmatmul.mubr.f32.gmra.mxu0 %v89
    %v427 = vpop.f32.mrf.mxu0
    %v428 = vadd.f32 %v286, %v427
    %v429 = vpop.f32.mrf.mxu0
    %v430 = vadd.f32 %v288, %v429
    %431 = vdwg.mxu0
    %432 = vmatprep.subr.mxu0 %v153
    %433 = vmatpush1.msra.mxu0 %v152
    %434 = vmatprep.subr.mxu0 %v149
    %435 = vmatpush1.msra.mxu0 %v148
    %436 = vmatprep.subr.mxu0 %v145
    %437 = vmatpush1.msra.mxu0 %v144
    %438 = vmatprep.subr.mxu0 %v141
    %439 = vmatpush1.msra.mxu0 %v140
    %440 = vmatprep.subr.mxu0 %v137
    %441 = vmatpush1.msra.mxu0 %v136
    %442 = vmatprep.subr.mxu0 %v133
    %443 = vmatpush1.msra.mxu0 %v132
    %444 = vmatprep.subr.mxu0 %v129
    %445 = vmatpush1.msra.mxu0 %v128
    %446 = vmatprep.subr.mxu0 %v125
    %447 = vmatpush1.msra.mxu0 %v124
    %448 = vmatprep.subr.mxu0 %v121
    %449 = vmatpush1.msra.mxu0 %v120
    %450 = vmatprep.subr.mxu0 %v117
    %451 = vmatpush1.msra.mxu0 %v116
    %452 = vmatprep.subr.mxu0 %v113
    %453 = vmatpush1.msra.mxu0 %v112
    %454 = vmatprep.subr.mxu0 %v109
    %455 = vmatpush1.msra.mxu0 %v108
    %456 = vmatprep.subr.mxu0 %v105
    %457 = vmatpush1.msra.mxu0 %v104
    %458 = vmatprep.subr.mxu0 %v101
    %459 = vmatpush1.msra.mxu0 %v100
    %460 = vmatprep.subr.mxu0 %v97
    %461 = vmatpush1.msra.mxu0 %v96
    %462 = vmatprep.subr.mxu0 %v93
    %463 = vmatpush1.msra.mxu0 %v92
    %464 = vmatprep.subr.mxu0 0.0
    %465 = vmatpush2.msra.mxu0 0.0
    %466 = vmatprep.subr.mxu0 0.0
    %467 = vmatpush2.msra.mxu0 0.0
    %468 = vmatprep.subr.mxu0 0.0
    %469 = vmatpush2.msra.mxu0 0.0
    %470 = vmatprep.subr.mxu0 0.0
    %471 = vmatpush2.msra.mxu0 0.0
    %472 = vmatprep.subr.mxu0 0.0
    %473 = vmatpush2.msra.mxu0 0.0
    %474 = vmatprep.subr.mxu0 0.0
    %475 = vmatpush2.msra.mxu0 0.0
    %476 = vmatprep.subr.mxu0 0.0
    %477 = vmatpush2.msra.mxu0 0.0
    %478 = vmatprep.subr.mxu0 0.0
    %479 = vmatpush2.msra.mxu0 0.0
    %480 = vmatprep.subr.mxu0 0.0
    %481 = vmatpush2.msra.mxu0 0.0
    %482 = vmatprep.subr.mxu0 0.0
    %483 = vmatpush2.msra.mxu0 0.0
    %484 = vmatprep.subr.mxu0 0.0
    %485 = vmatpush2.msra.mxu0 0.0
    %486 = vmatprep.subr.mxu0 0.0
    %487 = vmatpush2.msra.mxu0 0.0
    %488 = vmatprep.subr.mxu0 0.0
    %489 = vmatpush2.msra.mxu0 0.0
    %490 = vmatprep.subr.mxu0 0.0
    %491 = vmatpush2.msra.mxu0 0.0
    %492 = vmatprep.subr.mxu0 0.0
    %493 = vmatpush2.msra.mxu0 0.0
    %494 = vmatprep.subr.mxu0 0.0
    %495 = vmatpush2.msra.mxu0 0.0
    %496 = vmatprep.mubr.f32.mxu0 0.0
    %497 = vmatmul.mubr.f32.gmra.mxu0 %v89
    %v498 = vpop.f32.mrf.mxu0
    %v499 = vadd.f32 %v357, %v498
    %v500 = vpop.f32.mrf.mxu0
    %v501 = vadd.f32 %v359, %v500
    %502 = vdwg.mxu0
    %v503 = vld [vmem:[%s5] sm:$0xf]
    %v505 = vlaneseq
    %v506 = vshrl.u32 %v505, 7
    %v507 = vsub.s32 0, %v506
    %v508 = vrot.slane %v503, %v507
    %v509 = vlaneseq
    %v510 = vshrl.u32 %v509, 7
    %v511 = vsub.s32 1, %v510
    %v512 = vrot.slane %v503, %v511
    %v513 = vlaneseq
    %v514 = vshrl.u32 %v513, 7
    %v515 = vsub.s32 2, %v514
    %v516 = vrot.slane %v503, %v515
    %v517 = vlaneseq
    %v518 = vshrl.u32 %v517, 7
    %v519 = vsub.s32 3, %v518
    %v520 = vrot.slane %v503, %v519
    %v525 = vadd.f32 %v428, %v508
    %v526 = vadd.f32 %v430, %v512
    %v527 = vadd.f32 %v499, %v516
    %v528 = vadd.f32 %v501, %v520
    %v529 = vld [vmem:[#allocation7] sm:$0xff]
    %v530 = vmul.f32 %v525, 0.5
    %v531 = vtanh.pop %v530
    %v532 = vmul.f32 %v531, 0.5
    %v533 = vadd.f32 %v532, 0.5
    %v534 = vmul.f32 %v526, 0.5
    %v535 = vtanh.pop %v534
    %v536 = vmul.f32 %v535, 0.5
    %v537 = vadd.f32 %v536, 0.5
    %v538 = vmul.f32 %v527, 0.5
    %v539 = vtanh.pop %v538
    %v540 = vmul.f32 %v539, 0.5
    %v541 = vadd.f32 %v540, 0.5
    %v542 = vtanh.pop %v528
    %v543 = vmul.f32 %v537, %v542
    %v544 = vmul.f32 %v533, %v529
    %v545 = vadd.f32 %v543, %v544
    %v546 = vtanh.pop %v545
    %v547 = vmul.f32 %v541, %v546
    %548 = vst [vmem:[#allocation11] sm:$0xff] %v547
    %549 = vst [vmem:[#allocation12] sm:$0xff] %v545
    // Predicated region
    $region46: #{tpu_custom_call.1} parent=1 // pred_check
      _
    $region47: #{tpu_custom_call.1} parent=1 // pred_check_branch
      %551 = sbr.rel (0) target = $region49
    $region48: #{tpu_custom_call.1} parent=1 // pred_region
      %s553 = ssub.s32 128, 128
      %554 = vsyncadd [#allocation4], %s553
      %s556 = sshll.u32 [#allocation11], 4
      %s557 = int_to_ptr.vmem [resolvable:$true] %s556
      %559 = dma.vmem_to_hbm [thread:$0]  %s557, 128, %s6, [#allocation4]
    $region49: #{tpu_custom_call.1} parent=1 // pred_fallthru
      _
    // Predicated region
    $region50: #{tpu_custom_call.1} parent=1 // pred_check
      _
    $region51: #{tpu_custom_call.1} parent=1 // pred_check_branch
      %561 = sbr.rel (0) target = $region53
    $region52: #{tpu_custom_call.1} parent=1 // pred_region
      %s563 = ssub.s32 128, 128
      %564 = vsyncadd [#allocation13], %s563
      %s566 = sshll.u32 [#allocation12], 4
      %s567 = int_to_ptr.vmem [resolvable:$true] %s566
      %569 = dma.vmem_to_hbm [thread:$0]  %s567, 128, %s7, [#allocation13]
    $region53: #{tpu_custom_call.1} parent=1 // pred_fallthru
      _
    // Predicated region
    $region54: #{tpu_custom_call.1} parent=1 // pred_check
      _
    $region55: #{tpu_custom_call.1} parent=1 // pred_check_branch
      %571 = sbr.rel (0) target = $region57
    $region56: #{tpu_custom_call.1} parent=1 // pred_region
      %572 = dma.done [#allocation4], 128
    $region57: #{tpu_custom_call.1} parent=1 // pred_fallthru
      _
    // Predicated region
    $region58: #{tpu_custom_call.1} parent=1 // pred_check
      _
    $region59: #{tpu_custom_call.1} parent=1 // pred_check_branch
      %574 = sbr.rel (0) target = $region61
    $region60: #{tpu_custom_call.1} parent=1 // pred_region
      %575 = dma.done [#allocation13], 128
    $region61: #{tpu_custom_call.1} parent=1 // pred_fallthru
      _
    %576 = vsyncpa [#allocation3], 1
    %577 = vsyncpa [#allocation6], 1
    %578 = vsyncpa [#allocation9], 1
    %579 = vsyncpa [#allocation4], 1
    %580 = vsyncpa [#allocation13], 1

</llo_original>
